<compile_context>
chip_gen: v5e
topology: v5e:2x2
jax: 0.10.0
libtpu: 0.0.40
codegen_flags: <defaults>
</compile_context>

<pallas_src>
import math

import jax
import jax.numpy as jnp
from jax.experimental import pallas as pl
from jax.experimental.pallas import tpu as pltpu


# ----------------------------------------------------------------------------
# Fused Pallas kernel: recurrence + decoder in one invocation
# ----------------------------------------------------------------------------
def fused_rnn_kernel(xproj_ref, w_hh_ref, h0_ref, w_lin_ref, b_lin_ref,
                     out_ref, hn_ref):
    """Single-invocation fused RNN forward.

    xproj_ref : (T, B, H)  precomputed  W_ih^T[token_t] + b_ih + b_hh
    w_hh_ref  : (H, H)     hidden-to-hidden weights (already transposed)
    h0_ref    : (B, H)     initial hidden state
    w_lin_ref : (H, V)     decoder weights (already transposed)
    b_lin_ref : (1, V)     decoder bias
    out_ref   : (T*B, V)   logits
    hn_ref    : (B, H)     final hidden state
    """
    T = xproj_ref.shape[0]
    w_hh = w_hh_ref[...]          # load once, resident in vregs
    h = h0_ref[...]               # (B, H) carried in vregs

    ys = []
    for t in range(T):            # T is small & static: full unroll, whole chain
        h = jnp.tanh(             # visible to the LLO scheduler
            xproj_ref[t]
            + jnp.dot(h, w_hh, preferred_element_type=jnp.float32))
        ys.append(h)

    y = jnp.concatenate(ys, axis=0)                          # (T*B, H), vregs only
    logits = (jnp.dot(y, w_lin_ref[...], preferred_element_type=jnp.float32)
              + b_lin_ref[...])                              # (T*B, V)
    out_ref[...] = logits.astype(out_ref.dtype)
    hn_ref[...] = h.astype(hn_ref.dtype)


def fused_forward_pallas(x_proj, w_hh_t, h0, w_lin_t, b_lin):
    """x_proj: (T, B, H); returns logits (T*B, V) and h_n (B, H)."""
    T, B, H = x_proj.shape
    V = w_lin_t.shape[1]
    vmem = pl.BlockSpec(memory_space=pltpu.MemorySpace.VMEM)  # whole array in VMEM
    return pl.pallas_call(
        fused_rnn_kernel,
        out_shape=(
            jax.ShapeDtypeStruct((T * B, V), jnp.float32),
            jax.ShapeDtypeStruct((B, H), jnp.float32),
        ),
        in_specs=[vmem, vmem, vmem, vmem, vmem],
        out_specs=(vmem, vmem),
        # All operands total < 100 KiB: no grid / no tiling needed.
    )(x_proj, w_hh_t, h0, w_lin_t, b_lin)


# ----------------------------------------------------------------------------
# Model wrapper (mirror of RNNModel.forward)
# ----------------------------------------------------------------------------
def rnn_model_forward(inputs, state, params, vocab_size):
    """inputs: (batch, seq) int32 ids; state: (1, batch, hidden) f32.

    Returns (output (seq*batch, vocab), new_state (1, batch, hidden)).
    """
    w_ih, w_hh, b_ih, b_hh, w_lin, b_lin = params

    tokens = inputs.T                                   # (T, B), like inputs.T in torch
    # one_hot(tokens, V) @ W_ih^T  ==  W_ih^T[tokens]   (exact row gather)
    x_proj = jnp.take(w_ih.T, tokens, axis=0) + (b_ih + b_hh)   # (T, B, H)

    h0 = state[0]                                       # (B, H)
    out, hn = fused_forward_pallas(
        x_proj.astype(jnp.float32),
        w_hh.T,                                         # (H, H)
        h0,
        w_lin.T,                                        # (H, V)
        b_lin.reshape(1, -1),                           # (1, V)
    )
    return out, hn[None, :, :]                          # (T*B, V), (1, B, H)


# ----------------------------------------------------------------------------
# Pure-JAX reference (one-hot formulation, matches the PyTorch module)
# ----------------------------------------------------------------------------
def rnn_model_forward_ref(inputs, state, params, vocab_size):
    x = jax.nn.one_hot(inputs.T, vocab_size, dtype=jnp.float32)
    w_ih, w_hh, b_ih, b_hh, w_lin, b_lin = params
    h = state[0]

    def step(h, xt):
        h_new = jnp.tanh(xt @ w_ih.T + b_ih + h @ w_hh.T + b_hh)
        return h_new, h_new

    hn, ys = jax.lax.scan(step, h, x)
    out = ys.reshape(-1, ys.shape[-1]) @ w_lin.T + b_lin
    return out, hn[None, :, :]


# ----------------------------------------------------------------------------
# Main
# ----------------------------------------------------------------------------
if __name__ == "__main__":
    batch = 8
    seq = 8
    vocab = 32
    hidden = 32

    key = jax.random.PRNGKey(0)
    k_in, k_wih, k_whh, k_bih, k_bhh, k_wl, k_bl = jax.random.split(key, 7)

    # Deterministic parameter init (PyTorch-style uniform(-1/sqrt(H), 1/sqrt(H)))
    bound = 1.0 / math.sqrt(hidden)
    w_ih = jax.random.uniform(k_wih, (hidden, vocab), jnp.float32, -bound, bound)
    w_hh = jax.random.uniform(k_whh, (hidden, hidden), jnp.float32, -bound, bound)
    b_ih = jax.random.uniform(k_bih, (hidden,), jnp.float32, -bound, bound)
    b_hh = jax.random.uniform(k_bhh, (hidden,), jnp.float32, -bound, bound)
    w_lin = jax.random.uniform(k_wl, (vocab, hidden), jnp.float32, -bound, bound)
    b_lin = jax.random.uniform(k_bl, (vocab,), jnp.float32, -bound, bound)
    params = (w_ih, w_hh, b_ih, b_hh, w_lin, b_lin)

    # Inputs: (batch, seq) token ids; initial state (1, batch, hidden) zeros.
    inputs = jax.random.randint(k_in, (batch, seq), 0, vocab, dtype=jnp.int32)
    state0 = jnp.zeros((1, batch, hidden), jnp.float32)

    out, new_state = rnn_model_forward(inputs, state0, params, vocab)
    out = jax.block_until_ready(out)
    new_state = jax.block_until_ready(new_state)

    # Sanity check against pure-JAX reference.
    out_ref, state_ref = rnn_model_forward_ref(inputs, state0, params, vocab)
    assert out.shape == (seq * batch, vocab)
    assert new_state.shape == (1, batch, hidden)
    assert jnp.allclose(out, out_ref, atol=1e-5, rtol=1e-5)
    assert jnp.allclose(new_state, state_ref, atol=1e-5, rtol=1e-5)

    print("KERNEL_OK")
</pallas_src>

<mosaic_0001>
module attributes {stable_mosaic.version = 11 : i64} {
  func.func @fused_rnn_kernel(%arg0: memref<8x8x32xf32, #tpu.memory_space<vmem>>, %arg1: memref<32x32xf32, #tpu.memory_space<vmem>>, %arg2: memref<8x32xf32, #tpu.memory_space<vmem>>, %arg3: memref<32x32xf32, #tpu.memory_space<vmem>>, %arg4: memref<1x32xf32, #tpu.memory_space<vmem>>, %arg5: memref<64x32xf32, #tpu.memory_space<vmem>>, %arg6: memref<8x32xf32, #tpu.memory_space<vmem>>) attributes {dimension_semantics = [], scalar_prefetch = 0 : i64, scratch_operands = 0 : i64, tpu.core_type = #tpu.core_type<tc>} {
    %c0 = arith.constant 0 : index
    %c0_0 = arith.constant 0 : index
    %0 = vector.load %arg1[%c0, %c0_0] : memref<32x32xf32, #tpu.memory_space<vmem>>, vector<32x32xf32>
    %c0_1 = arith.constant 0 : index
    %c0_2 = arith.constant 0 : index
    %1 = vector.load %arg2[%c0_1, %c0_2] : memref<8x32xf32, #tpu.memory_space<vmem>>, vector<8x32xf32>
    %c0_3 = arith.constant 0 : index
    %c0_4 = arith.constant 0 : index
    %c0_5 = arith.constant 0 : index
    %2 = vector.load %arg0[%c0_3, %c0_4, %c0_5] : memref<8x8x32xf32, #tpu.memory_space<vmem>>, vector<1x8x32xf32>
    %3 = vector.shape_cast %2 : vector<1x8x32xf32> to vector<8x32xf32>
    %cst = arith.constant dense<0.000000e+00> : vector<8x32xf32>
    %4 = tpu.matmul %1, %0, %cst {dimension_numbers = #tpu.dot_dimension_numbers<[1], [0], [0], [1], [0, 0, 1, 1], [], []>} : vector<8x32xf32>, vector<32x32xf32>, vector<8x32xf32> -> vector<8x32xf32>
    %5 = arith.addf %3, %4 : vector<8x32xf32>
    %6 = math.tanh %5 : vector<8x32xf32>
    %c1 = arith.constant 1 : index
    %c0_6 = arith.constant 0 : index
    %c0_7 = arith.constant 0 : index
    %7 = vector.load %arg0[%c1, %c0_6, %c0_7] : memref<8x8x32xf32, #tpu.memory_space<vmem>>, vector<1x8x32xf32>
    %8 = vector.shape_cast %7 : vector<1x8x32xf32> to vector<8x32xf32>
    %cst_8 = arith.constant dense<0.000000e+00> : vector<8x32xf32>
    %9 = tpu.matmul %6, %0, %cst_8 {dimension_numbers = #tpu.dot_dimension_numbers<[1], [0], [0], [1], [0, 0, 1, 1], [], []>} : vector<8x32xf32>, vector<32x32xf32>, vector<8x32xf32> -> vector<8x32xf32>
    %10 = arith.addf %8, %9 : vector<8x32xf32>
    %11 = math.tanh %10 : vector<8x32xf32>
    %c2 = arith.constant 2 : index
    %c0_9 = arith.constant 0 : index
    %c0_10 = arith.constant 0 : index
    %12 = vector.load %arg0[%c2, %c0_9, %c0_10] : memref<8x8x32xf32, #tpu.memory_space<vmem>>, vector<1x8x32xf32>
    %13 = vector.shape_cast %12 : vector<1x8x32xf32> to vector<8x32xf32>
    %cst_11 = arith.constant dense<0.000000e+00> : vector<8x32xf32>
    %14 = tpu.matmul %11, %0, %cst_11 {dimension_numbers = #tpu.dot_dimension_numbers<[1], [0], [0], [1], [0, 0, 1, 1], [], []>} : vector<8x32xf32>, vector<32x32xf32>, vector<8x32xf32> -> vector<8x32xf32>
    %15 = arith.addf %13, %14 : vector<8x32xf32>
    %16 = math.tanh %15 : vector<8x32xf32>
    %c3 = arith.constant 3 : index
    %c0_12 = arith.constant 0 : index
    %c0_13 = arith.constant 0 : index
    %17 = vector.load %arg0[%c3, %c0_12, %c0_13] : memref<8x8x32xf32, #tpu.memory_space<vmem>>, vector<1x8x32xf32>
    %18 = vector.shape_cast %17 : vector<1x8x32xf32> to vector<8x32xf32>
    %cst_14 = arith.constant dense<0.000000e+00> : vector<8x32xf32>
    %19 = tpu.matmul %16, %0, %cst_14 {dimension_numbers = #tpu.dot_dimension_numbers<[1], [0], [0], [1], [0, 0, 1, 1], [], []>} : vector<8x32xf32>, vector<32x32xf32>, vector<8x32xf32> -> vector<8x32xf32>
    %20 = arith.addf %18, %19 : vector<8x32xf32>
    %21 = math.tanh %20 : vector<8x32xf32>
    %c4 = arith.constant 4 : index
    %c0_15 = arith.constant 0 : index
    %c0_16 = arith.constant 0 : index
    %22 = vector.load %arg0[%c4, %c0_15, %c0_16] : memref<8x8x32xf32, #tpu.memory_space<vmem>>, vector<1x8x32xf32>
    %23 = vector.shape_cast %22 : vector<1x8x32xf32> to vector<8x32xf32>
    %cst_17 = arith.constant dense<0.000000e+00> : vector<8x32xf32>
    %24 = tpu.matmul %21, %0, %cst_17 {dimension_numbers = #tpu.dot_dimension_numbers<[1], [0], [0], [1], [0, 0, 1, 1], [], []>} : vector<8x32xf32>, vector<32x32xf32>, vector<8x32xf32> -> vector<8x32xf32>
    %25 = arith.addf %23, %24 : vector<8x32xf32>
    %26 = math.tanh %25 : vector<8x32xf32>
    %c5 = arith.constant 5 : index
    %c0_18 = arith.constant 0 : index
    %c0_19 = arith.constant 0 : index
    %27 = vector.load %arg0[%c5, %c0_18, %c0_19] : memref<8x8x32xf32, #tpu.memory_space<vmem>>, vector<1x8x32xf32>
    %28 = vector.shape_cast %27 : vector<1x8x32xf32> to vector<8x32xf32>
    %cst_20 = arith.constant dense<0.000000e+00> : vector<8x32xf32>
    %29 = tpu.matmul %26, %0, %cst_20 {dimension_numbers = #tpu.dot_dimension_numbers<[1], [0], [0], [1], [0, 0, 1, 1], [], []>} : vector<8x32xf32>, vector<32x32xf32>, vector<8x32xf32> -> vector<8x32xf32>
    %30 = arith.addf %28, %29 : vector<8x32xf32>
    %31 = math.tanh %30 : vector<8x32xf32>
    %c6 = arith.constant 6 : index
    %c0_21 = arith.constant 0 : index
    %c0_22 = arith.constant 0 : index
    %32 = vector.load %arg0[%c6, %c0_21, %c0_22] : memref<8x8x32xf32, #tpu.memory_space<vmem>>, vector<1x8x32xf32>
    %33 = vector.shape_cast %32 : vector<1x8x32xf32> to vector<8x32xf32>
    %cst_23 = arith.constant dense<0.000000e+00> : vector<8x32xf32>
    %34 = tpu.matmul %31, %0, %cst_23 {dimension_numbers = #tpu.dot_dimension_numbers<[1], [0], [0], [1], [0, 0, 1, 1], [], []>} : vector<8x32xf32>, vector<32x32xf32>, vector<8x32xf32> -> vector<8x32xf32>
    %35 = arith.addf %33, %34 : vector<8x32xf32>
    %36 = math.tanh %35 : vector<8x32xf32>
    %c7 = arith.constant 7 : index
    %c0_24 = arith.constant 0 : index
    %c0_25 = arith.constant 0 : index
    %37 = vector.load %arg0[%c7, %c0_24, %c0_25] : memref<8x8x32xf32, #tpu.memory_space<vmem>>, vector<1x8x32xf32>
    %38 = vector.shape_cast %37 : vector<1x8x32xf32> to vector<8x32xf32>
    %cst_26 = arith.constant dense<0.000000e+00> : vector<8x32xf32>
    %39 = tpu.matmul %36, %0, %cst_26 {dimension_numbers = #tpu.dot_dimension_numbers<[1], [0], [0], [1], [0, 0, 1, 1], [], []>} : vector<8x32xf32>, vector<32x32xf32>, vector<8x32xf32> -> vector<8x32xf32>
    %40 = arith.addf %38, %39 : vector<8x32xf32>
    %41 = math.tanh %40 : vector<8x32xf32>
    %42 = tpu.concatenate %6, %11, %16, %21, %26, %31, %36, %41 in 0 : vector<8x32xf32>, vector<8x32xf32>, vector<8x32xf32>, vector<8x32xf32>, vector<8x32xf32>, vector<8x32xf32>, vector<8x32xf32>, vector<8x32xf32> -> vector<64x32xf32>
    %c0_27 = arith.constant 0 : index
    %c0_28 = arith.constant 0 : index
    %43 = vector.load %arg3[%c0_27, %c0_28] : memref<32x32xf32, #tpu.memory_space<vmem>>, vector<32x32xf32>
    %cst_29 = arith.constant dense<0.000000e+00> : vector<64x32xf32>
    %44 = tpu.matmul %42, %43, %cst_29 {dimension_numbers = #tpu.dot_dimension_numbers<[1], [0], [0], [1], [0, 0, 1, 1], [], []>} : vector<64x32xf32>, vector<32x32xf32>, vector<64x32xf32> -> vector<64x32xf32>
    %c0_30 = arith.constant 0 : index
    %c0_31 = arith.constant 0 : index
    %45 = vector.load %arg4[%c0_30, %c0_31] : memref<1x32xf32, #tpu.memory_space<vmem>>, vector<1x32xf32>
    %46 = vector.broadcast %45 : vector<1x32xf32> to vector<64x32xf32>
    %47 = arith.addf %44, %46 : vector<64x32xf32>
    %c0_32 = arith.constant 0 : index
    %c0_33 = arith.constant 0 : index
    %48 = vector.load %arg5[%c0_32, %c0_33] : memref<64x32xf32, #tpu.memory_space<vmem>>, vector<64x32xf32>
    tpu.vector_store %arg5[%c0_32, %c0_33], %47 {strides = array<i32>} : memref<64x32xf32, #tpu.memory_space<vmem>>, vector<64x32xf32>,
    %c0_34 = arith.constant 0 : index
    %c0_35 = arith.constant 0 : index
    %49 = vector.load %arg6[%c0_34, %c0_35] : memref<8x32xf32, #tpu.memory_space<vmem>>, vector<8x32xf32>
    tpu.vector_store %arg6[%c0_34, %c0_35], %41 {strides = array<i32>} : memref<8x32xf32, #tpu.memory_space<vmem>>, vector<8x32xf32>,
    return
  }
}

</mosaic_0001>

<llo_original>
// kernel: tpu_custom_call.1
$region0: #{tpu_custom_call.1}
  #allocation0 [shape = 'u32[]', space=smem, size = 0x4, offset = 0x4, fixed_abs, tag = 'smem constant byte address 0x4 - core index']
  #allocation1 [shape = 'u32[72,128]{1,0:T(1,128)}', space=vmem, size = 0x9000, scoped, tag = 'internal scratch']
  %s0 = inlined_call_operand.hbm [shape: f32[8,8,32], index: 0, kind: input, shape index: {}]
  %s1 = inlined_call_operand.hbm [shape: f32[32,32], index: 1, kind: input, shape index: {}]
  %s2 = inlined_call_operand.hbm [shape: f32[8,32], index: 2, kind: input, shape index: {}]
  %s3 = inlined_call_operand.hbm [shape: f32[32,32], index: 3, kind: input, shape index: {}]
  %s4 = inlined_call_operand.vmem [shape: f32[1,32], index: 4, kind: input, shape index: {}]
  %s5 = inlined_call_operand.vmem [shape: f32[64,32], index: 5, kind: output, shape index: {0}]
  %s6 = inlined_call_operand.hbm [shape: f32[8,32], index: 6, kind: output, shape index: {1}]
  %7 = xla_tuple %s5, %s6
  %s8 = sld [smem:[#allocation0]]
  $region54: #{tpu_custom_call.1} parent=0
    _
  %s10 = ssub.s32 1, %s8
  %s11 = scalar_select 0, %s10, %s8
  $region1: #{tpu_custom_call.1} parent=0
    #allocation2 [shape = 'u8[32768]{0}', space=vmem, size = 0x8000, scoped, tag = 'input window, operand 0, single buffered']
    #allocation3 [shape = 's32[1]{0}', space=sflag, size = 0x4, scoped, tag = 'scoped memory for tpu_custom_call.1']
    #allocation4 [shape = 's32[1]{0}', space=sflag, size = 0x4, scoped, tag = 'scoped memory for tpu_custom_call.1']
    #allocation5 [shape = 'u8[16384]{0}', space=vmem, size = 0x4000, scoped, tag = 'input window, operand 1, single buffered']
    #allocation6 [shape = 's32[1]{0}', space=sflag, size = 0x4, scoped, tag = 'scoped memory for tpu_custom_call.1']
    #allocation7 [shape = 'u8[4096]{0}', space=vmem, size = 0x1000, scoped, tag = 'input window, operand 2, single buffered']
    #allocation8 [shape = 'u8[16384]{0}', space=vmem, size = 0x4000, scoped, tag = 'input window, operand 3, single buffered']
    #allocation9 [shape = 's32[1]{0}', space=sflag, size = 0x4, scoped, tag = 'scoped memory for tpu_custom_call.1']
    #allocation10 [shape = 'u8[4096]{0}', space=vmem, size = 0x1000, scoped, tag = 'output window, operand 1, single buffered']
    %12 = vsyncpa [#allocation3], 0
    %13 = vsyncpa [#allocation6], 0
    %14 = vsyncpa [#allocation9], 0
    %15 = vsyncpa [#allocation4], 0
    // Predicated region
    $region2: #{tpu_custom_call.1} parent=1 // pred_check
      _
    $region3: #{tpu_custom_call.1} parent=1 // pred_check_branch
      %17 = sbr.rel (0) target = $region5
    $region4: #{tpu_custom_call.1} parent=1 // pred_region
      %19 = vsyncadd [#allocation3], 0
      %s20 = sshll.u32 %s0, 4
      %s21 = int_to_ptr.hbm [resolvable:$true] %s20
      %s22 = sshll.u32 [#allocation2], 4
      %s23 = int_to_ptr.vmem [resolvable:$true] %s22
      %28 = dma.hbm_to_vmem [thread:$0]  %s21, 1024, %s23, [#allocation3], 128, 128, 8
    $region5: #{tpu_custom_call.1} parent=1 // pred_fallthru
      _
    // Predicated region
    $region6: #{tpu_custom_call.1} parent=1 // pred_check
      _
    $region7: #{tpu_custom_call.1} parent=1 // pred_check_branch
      %30 = sbr.rel (0) target = $region9
    $region8: #{tpu_custom_call.1} parent=1 // pred_region
      %32 = vsyncadd [#allocation6], 0
      %s33 = sshll.u32 %s1, 4
      %s34 = int_to_ptr.hbm [resolvable:$true] %s33
      %s35 = sshll.u32 [#allocation5], 4
      %s36 = int_to_ptr.vmem [resolvable:$true] %s35
      %41 = dma.hbm_to_vmem [thread:$0]  %s34, 512, %s36, [#allocation6], 128, 128, 8
    $region9: #{tpu_custom_call.1} parent=1 // pred_fallthru
      _
    // Predicated region
    $region10: #{tpu_custom_call.1} parent=1 // pred_check
      _
    $region11: #{tpu_custom_call.1} parent=1 // pred_check_branch
      %43 = sbr.rel (0) target = $region13
    $region12: #{tpu_custom_call.1} parent=1 // pred_region
      %45 = vsyncadd [#allocation6], 0
      %s47 = sshll.u32 %s2, 4
      %s48 = int_to_ptr.hbm [resolvable:$true] %s47
      %s49 = sshll.u32 [#allocation7], 4
      %s50 = int_to_ptr.vmem [resolvable:$true] %s49
      %52 = dma.hbm_to_vmem [thread:$0]  %s48, 128, %s50, [#allocation6]
    $region13: #{tpu_custom_call.1} parent=1 // pred_fallthru
      _
    // Predicated region
    $region14: #{tpu_custom_call.1} parent=1 // pred_check
      _
    $region15: #{tpu_custom_call.1} parent=1 // pred_check_branch
      %54 = sbr.rel (0) target = $region17
    $region16: #{tpu_custom_call.1} parent=1 // pred_region
      %56 = vsyncadd [#allocation9], 0
      %s57 = sshll.u32 %s3, 4
      %s58 = int_to_ptr.hbm [resolvable:$true] %s57
      %s59 = sshll.u32 [#allocation8], 4
      %s60 = int_to_ptr.vmem [resolvable:$true] %s59
      %65 = dma.hbm_to_vmem [thread:$0]  %s58, 512, %s60, [#allocation9], 128, 128, 8
    $region17: #{tpu_custom_call.1} parent=1 // pred_fallthru
      _
    // Predicated region
    $region18: #{tpu_custom_call.1} parent=1 // pred_check
      _
    $region19: #{tpu_custom_call.1} parent=1 // pred_check_branch
      %67 = sbr.rel (0) target = $region21
    $region20: #{tpu_custom_call.1} parent=1 // pred_region
      _
    $region21: #{tpu_custom_call.1} parent=1 // pred_fallthru
      _
    // Predicated region
    $region22: #{tpu_custom_call.1} parent=1 // pred_check
      _
    $region23: #{tpu_custom_call.1} parent=1 // pred_check_branch
      %69 = sbr.rel (0) target = $region25
    $region24: #{tpu_custom_call.1} parent=1 // pred_region
      %71 = dma.done [#allocation3], 1024
    $region25: #{tpu_custom_call.1} parent=1 // pred_fallthru
      _
    // Predicated region
    $region26: #{tpu_custom_call.1} parent=1 // pred_check
      _
    $region27: #{tpu_custom_call.1} parent=1 // pred_check_branch
      %73 = sbr.rel (0) target = $region29
    $region28: #{tpu_custom_call.1} parent=1 // pred_region
      %75 = dma.done [#allocation6], 512
    $region29: #{tpu_custom_call.1} parent=1 // pred_fallthru
      _
    // Predicated region
    $region30: #{tpu_custom_call.1} parent=1 // pred_check
      _
    $region31: #{tpu_custom_call.1} parent=1 // pred_check_branch
      %77 = sbr.rel (0) target = $region33
    $region32: #{tpu_custom_call.1} parent=1 // pred_region
      %79 = dma.done [#allocation6], 128
    $region33: #{tpu_custom_call.1} parent=1 // pred_fallthru
      _
    // Predicated region
    $region34: #{tpu_custom_call.1} parent=1 // pred_check
      _
    $region35: #{tpu_custom_call.1} parent=1 // pred_check_branch
      %81 = sbr.rel (0) target = $region37
    $region36: #{tpu_custom_call.1} parent=1 // pred_region
      %83 = dma.done [#allocation9], 512
    $region37: #{tpu_custom_call.1} parent=1 // pred_fallthru
      _
    %v84 = vld [vmem:[#allocation5] sm:$0xff]
    %v85 = vld [vmem:[#allocation5 + $0x8] sm:$0xff]
    %v86 = vld [vmem:[#allocation5 + $0x10] sm:$0xff]
    %v87 = vld [vmem:[#allocation5 + $0x18] sm:$0xff]
    %v88 = vld [vmem:[#allocation7] sm:$0xff]
    %v89 = vld [vmem:[#allocation2] sm:$0xff]
    %vm90 = vcmask 261120
    %v92 = vsel %vm90, %v88, 0
    %94 = vmatpush.msra.mxu0 0.0
    %95 = vmatpush.msra.mxu0 0.0
    %96 = vmatpush.msra.mxu0 0.0
    %97 = vmatpush.msra.mxu0 0.0
    %98 = vmatpush.msra.mxu0 0.0
    %99 = vmatpush.msra.mxu0 0.0
    %100 = vmatpush.msra.mxu0 0.0
    %101 = vmatpush.msra.mxu0 0.0
    %102 = vmatpush.msra.mxu0 0.0
    %103 = vmatpush.msra.mxu0 0.0
    %104 = vmatpush.msra.mxu0 0.0
    %105 = vmatpush.msra.mxu0 0.0
    %106 = vmatpush.msra.mxu0 %v87
    %107 = vmatpush.msra.mxu0 %v86
    %108 = vmatpush.msra.mxu0 %v85
    %109 = vmatpush.msra.mxu0 %v84
    %110 = vmatmul.f32.gmra.mxu0 %v92
    %v111 = vpop.f32.mrf.mxu0
    %v112 = vadd.f32 0.0, %v111
    %113 = vdwg.mxu0
    %v114 = vadd.f32 %v89, %v112
    %v115 = vtanh.pop %v114
    %s116 = scalar_lea.vmem [#allocation2], 8
    %v117 = vld [vmem:[%s116] sm:$0xff]
    %v119 = vsel %vm90, %v115, 0
    %121 = vmatpush.msra.mxu0 0.0
    %122 = vmatpush.msra.mxu0 0.0
    %123 = vmatpush.msra.mxu0 0.0
    %124 = vmatpush.msra.mxu0 0.0
    %125 = vmatpush.msra.mxu0 0.0
    %126 = vmatpush.msra.mxu0 0.0
    %127 = vmatpush.msra.mxu0 0.0
    %128 = vmatpush.msra.mxu0 0.0
    %129 = vmatpush.msra.mxu0 0.0
    %130 = vmatpush.msra.mxu0 0.0
    %131 = vmatpush.msra.mxu0 0.0
    %132 = vmatpush.msra.mxu0 0.0
    %133 = vmatpush.msra.mxu0 %v87
    %134 = vmatpush.msra.mxu0 %v86
    %135 = vmatpush.msra.mxu0 %v85
    %136 = vmatpush.msra.mxu0 %v84
    %137 = vmatmul.f32.gmra.mxu0 %v119
    %v138 = vpop.f32.mrf.mxu0
    %v139 = vadd.f32 0.0, %v138
    %140 = vdwg.mxu0
    %v141 = vadd.f32 %v117, %v139
    %v142 = vtanh.pop %v141
    %s143 = scalar_lea.vmem [#allocation2], 16
    %v144 = vld [vmem:[%s143] sm:$0xff]
    %v146 = vsel %vm90, %v142, 0
    %148 = vmatpush.msra.mxu0 0.0
    %149 = vmatpush.msra.mxu0 0.0
    %150 = vmatpush.msra.mxu0 0.0
    %151 = vmatpush.msra.mxu0 0.0
    %152 = vmatpush.msra.mxu0 0.0
    %153 = vmatpush.msra.mxu0 0.0
    %154 = vmatpush.msra.mxu0 0.0
    %155 = vmatpush.msra.mxu0 0.0
    %156 = vmatpush.msra.mxu0 0.0
    %157 = vmatpush.msra.mxu0 0.0
    %158 = vmatpush.msra.mxu0 0.0
    %159 = vmatpush.msra.mxu0 0.0
    %160 = vmatpush.msra.mxu0 %v87
    %161 = vmatpush.msra.mxu0 %v86
    %162 = vmatpush.msra.mxu0 %v85
    %163 = vmatpush.msra.mxu0 %v84
    %164 = vmatmul.f32.gmra.mxu0 %v146
    %v165 = vpop.f32.mrf.mxu0
    %v166 = vadd.f32 0.0, %v165
    %167 = vdwg.mxu0
    %v168 = vadd.f32 %v144, %v166
    %v169 = vtanh.pop %v168
    %s170 = scalar_lea.vmem [#allocation2], 24
    %v171 = vld [vmem:[%s170] sm:$0xff]
    %v173 = vsel %vm90, %v169, 0
    %175 = vmatpush.msra.mxu0 0.0
    %176 = vmatpush.msra.mxu0 0.0
    %177 = vmatpush.msra.mxu0 0.0
    %178 = vmatpush.msra.mxu0 0.0
    %179 = vmatpush.msra.mxu0 0.0
    %180 = vmatpush.msra.mxu0 0.0
    %181 = vmatpush.msra.mxu0 0.0
    %182 = vmatpush.msra.mxu0 0.0
    %183 = vmatpush.msra.mxu0 0.0
    %184 = vmatpush.msra.mxu0 0.0
    %185 = vmatpush.msra.mxu0 0.0
    %186 = vmatpush.msra.mxu0 0.0
    %187 = vmatpush.msra.mxu0 %v87
    %188 = vmatpush.msra.mxu0 %v86
    %189 = vmatpush.msra.mxu0 %v85
    %190 = vmatpush.msra.mxu0 %v84
    %191 = vmatmul.f32.gmra.mxu0 %v173
    %v192 = vpop.f32.mrf.mxu0
    %v193 = vadd.f32 0.0, %v192
    %194 = vdwg.mxu0
    %v195 = vadd.f32 %v171, %v193
    %v196 = vtanh.pop %v195
    %s197 = scalar_lea.vmem [#allocation2], 32
    %v198 = vld [vmem:[%s197] sm:$0xff]
    %v200 = vsel %vm90, %v196, 0
    %202 = vmatpush.msra.mxu0 0.0
    %203 = vmatpush.msra.mxu0 0.0
    %204 = vmatpush.msra.mxu0 0.0
    %205 = vmatpush.msra.mxu0 0.0
    %206 = vmatpush.msra.mxu0 0.0
    %207 = vmatpush.msra.mxu0 0.0
    %208 = vmatpush.msra.mxu0 0.0
    %209 = vmatpush.msra.mxu0 0.0
    %210 = vmatpush.msra.mxu0 0.0
    %211 = vmatpush.msra.mxu0 0.0
    %212 = vmatpush.msra.mxu0 0.0
    %213 = vmatpush.msra.mxu0 0.0
    %214 = vmatpush.msra.mxu0 %v87
    %215 = vmatpush.msra.mxu0 %v86
    %216 = vmatpush.msra.mxu0 %v85
    %217 = vmatpush.msra.mxu0 %v84
    %218 = vmatmul.f32.gmra.mxu0 %v200
    %v219 = vpop.f32.mrf.mxu0
    %v220 = vadd.f32 0.0, %v219
    %221 = vdwg.mxu0
    %v222 = vadd.f32 %v198, %v220
    %v223 = vtanh.pop %v222
    %s224 = scalar_lea.vmem [#allocation2], 40
    %v225 = vld [vmem:[%s224] sm:$0xff]
    %v227 = vsel %vm90, %v223, 0
    %229 = vmatpush.msra.mxu0 0.0
    %230 = vmatpush.msra.mxu0 0.0
    %231 = vmatpush.msra.mxu0 0.0
    %232 = vmatpush.msra.mxu0 0.0
    %233 = vmatpush.msra.mxu0 0.0
    %234 = vmatpush.msra.mxu0 0.0
    %235 = vmatpush.msra.mxu0 0.0
    %236 = vmatpush.msra.mxu0 0.0
    %237 = vmatpush.msra.mxu0 0.0
    %238 = vmatpush.msra.mxu0 0.0
    %239 = vmatpush.msra.mxu0 0.0
    %240 = vmatpush.msra.mxu0 0.0
    %241 = vmatpush.msra.mxu0 %v87
    %242 = vmatpush.msra.mxu0 %v86
    %243 = vmatpush.msra.mxu0 %v85
    %244 = vmatpush.msra.mxu0 %v84
    %245 = vmatmul.f32.gmra.mxu0 %v227
    %v246 = vpop.f32.mrf.mxu0
    %v247 = vadd.f32 0.0, %v246
    %248 = vdwg.mxu0
    %v249 = vadd.f32 %v225, %v247
    %v250 = vtanh.pop %v249
    %s251 = scalar_lea.vmem [#allocation2], 48
    %v252 = vld [vmem:[%s251] sm:$0xff]
    %v254 = vsel %vm90, %v250, 0
    %256 = vmatpush.msra.mxu0 0.0
    %257 = vmatpush.msra.mxu0 0.0
    %258 = vmatpush.msra.mxu0 0.0
    %259 = vmatpush.msra.mxu0 0.0
    %260 = vmatpush.msra.mxu0 0.0
    %261 = vmatpush.msra.mxu0 0.0
    %262 = vmatpush.msra.mxu0 0.0
    %263 = vmatpush.msra.mxu0 0.0
    %264 = vmatpush.msra.mxu0 0.0
    %265 = vmatpush.msra.mxu0 0.0
    %266 = vmatpush.msra.mxu0 0.0
    %267 = vmatpush.msra.mxu0 0.0
    %268 = vmatpush.msra.mxu0 %v87
    %269 = vmatpush.msra.mxu0 %v86
    %270 = vmatpush.msra.mxu0 %v85
    %271 = vmatpush.msra.mxu0 %v84
    %272 = vmatmul.f32.gmra.mxu0 %v254
    %v273 = vpop.f32.mrf.mxu0
    %v274 = vadd.f32 0.0, %v273
    %275 = vdwg.mxu0
    %v276 = vadd.f32 %v252, %v274
    %v277 = vtanh.pop %v276
    %s278 = scalar_lea.vmem [#allocation2], 56
    %v279 = vld [vmem:[%s278] sm:$0xff]
    %v281 = vsel %vm90, %v277, 0
    %283 = vmatpush.msra.mxu0 0.0
    %284 = vmatpush.msra.mxu0 0.0
    %285 = vmatpush.msra.mxu0 0.0
    %286 = vmatpush.msra.mxu0 0.0
    %287 = vmatpush.msra.mxu0 0.0
    %288 = vmatpush.msra.mxu0 0.0
    %289 = vmatpush.msra.mxu0 0.0
    %290 = vmatpush.msra.mxu0 0.0
    %291 = vmatpush.msra.mxu0 0.0
    %292 = vmatpush.msra.mxu0 0.0
    %293 = vmatpush.msra.mxu0 0.0
    %294 = vmatpush.msra.mxu0 0.0
    %295 = vmatpush.msra.mxu0 %v87
    %296 = vmatpush.msra.mxu0 %v86
    %297 = vmatpush.msra.mxu0 %v85
    %298 = vmatpush.msra.mxu0 %v84
    %299 = vmatmul.f32.gmra.mxu0 %v281
    %v300 = vpop.f32.mrf.mxu0
    %v301 = vadd.f32 0.0, %v300
    %302 = vdwg.mxu0
    %v303 = vadd.f32 %v279, %v301
    %v304 = vtanh.pop %v303
    %v305 = vld [vmem:[#allocation8] sm:$0xff]
    %v306 = vld [vmem:[#allocation8 + $0x8] sm:$0xff]
    %v307 = vld [vmem:[#allocation8 + $0x10] sm:$0xff]
    %v308 = vld [vmem:[#allocation8 + $0x18] sm:$0xff]
    %v309 = vld [vmem:[%s4] sm:$0x1]
    %v311 = vperm.slane %v309, 0
    %v314 = vsel %vm90, %v304, 0
    %316 = vmatpush.msra.mxu0 0.0
    %317 = vmatpush.msra.mxu0 0.0
    %318 = vmatpush.msra.mxu0 0.0
    %319 = vmatpush.msra.mxu0 0.0
    %320 = vmatpush.msra.mxu0 0.0
    %321 = vmatpush.msra.mxu0 0.0
    %322 = vmatpush.msra.mxu0 0.0
    %323 = vmatpush.msra.mxu0 0.0
    %324 = vmatpush.msra.mxu0 0.0
    %325 = vmatpush.msra.mxu0 0.0
    %326 = vmatpush.msra.mxu0 0.0
    %327 = vmatpush.msra.mxu0 0.0
    %328 = vmatpush.msra.mxu0 %v308
    %329 = vmatpush.msra.mxu0 %v307
    %330 = vmatpush.msra.mxu0 %v306
    %331 = vmatpush.msra.mxu0 %v305
    %332 = vmatmul.f32.gmra.mxu0 %v119
    %v333 = vpop.f32.mrf.mxu0
    %v334 = vadd.f32 %v311, %v333
    %335 = vmatmul.f32.gmra.mxu0 %v146
    %v336 = vpop.f32.mrf.mxu0
    %v337 = vadd.f32 %v311, %v336
    %338 = vmatmul.f32.gmra.mxu0 %v173
    %v339 = vpop.f32.mrf.mxu0
    %v340 = vadd.f32 %v311, %v339
    %341 = vmatmul.f32.gmra.mxu0 %v200
    %v342 = vpop.f32.mrf.mxu0
    %v343 = vadd.f32 %v311, %v342
    %344 = vmatmul.f32.gmra.mxu0 %v227
    %v345 = vpop.f32.mrf.mxu0
    %v346 = vadd.f32 %v311, %v345
    %347 = vmatmul.f32.gmra.mxu0 %v254
    %v348 = vpop.f32.mrf.mxu0
    %v349 = vadd.f32 %v311, %v348
    %350 = vmatmul.f32.gmra.mxu0 %v281
    %v351 = vpop.f32.mrf.mxu0
    %v352 = vadd.f32 %v311, %v351
    %353 = vmatmul.f32.gmra.mxu0 %v314
    %v354 = vpop.f32.mrf.mxu0
    %v355 = vadd.f32 %v311, %v354
    %356 = vdwg.mxu0
    %357 = vst.msk [vmem:[%s5] sm:$0xff] %vm90, %v334
    %358 = vst.msk [vmem:[%s5 + $0x8] sm:$0xff] %vm90, %v337
    %359 = vst.msk [vmem:[%s5 + $0x10] sm:$0xff] %vm90, %v340
    %360 = vst.msk [vmem:[%s5 + $0x18] sm:$0xff] %vm90, %v343
    %361 = vst.msk [vmem:[%s5 + $0x20] sm:$0xff] %vm90, %v346
    %362 = vst.msk [vmem:[%s5 + $0x28] sm:$0xff] %vm90, %v349
    %363 = vst.msk [vmem:[%s5 + $0x30] sm:$0xff] %vm90, %v352
    %364 = vst.msk [vmem:[%s5 + $0x38] sm:$0xff] %vm90, %v355
    %365 = vst.msk [vmem:[#allocation10] sm:$0xff] %vm90, %v304
    // Predicated region
    $region38: #{tpu_custom_call.1} parent=1 // pred_check
      _
    $region39: #{tpu_custom_call.1} parent=1 // pred_check_branch
      %367 = sbr.rel (0) target = $region41
    $region40: #{tpu_custom_call.1} parent=1 // pred_region
      _
    $region41: #{tpu_custom_call.1} parent=1 // pred_fallthru
      _
    // Predicated region
    $region42: #{tpu_custom_call.1} parent=1 // pred_check
      _
    $region43: #{tpu_custom_call.1} parent=1 // pred_check_branch
      %369 = sbr.rel (0) target = $region45
    $region44: #{tpu_custom_call.1} parent=1 // pred_region
      %371 = vsyncadd [#allocation4], 0
      %s373 = sshll.u32 [#allocation10], 4
      %s374 = int_to_ptr.vmem [resolvable:$true] %s373
      %s375 = sshll.u32 %s6, 4
      %s376 = int_to_ptr.hbm [resolvable:$true] %s375
      %378 = dma.vmem_to_hbm [thread:$0]  %s374, 128, %s376, [#allocation4]
    $region45: #{tpu_custom_call.1} parent=1 // pred_fallthru
      _
    // Predicated region
    $region46: #{tpu_custom_call.1} parent=1 // pred_check
      _
    $region47: #{tpu_custom_call.1} parent=1 // pred_check_branch
      %380 = sbr.rel (0) target = $region49
    $region48: #{tpu_custom_call.1} parent=1 // pred_region
      _
    $region49: #{tpu_custom_call.1} parent=1 // pred_fallthru
      _
    // Predicated region
    $region50: #{tpu_custom_call.1} parent=1 // pred_check
      _
    $region51: #{tpu_custom_call.1} parent=1 // pred_check_branch
      %382 = sbr.rel (0) target = $region53
    $region52: #{tpu_custom_call.1} parent=1 // pred_region
      %384 = dma.done [#allocation4], 128
    $region53: #{tpu_custom_call.1} parent=1 // pred_fallthru
      _
    %385 = vsyncpa [#allocation3], 1
    %386 = vsyncpa [#allocation6], 1
    %387 = vsyncpa [#allocation9], 1
    %388 = vsyncpa [#allocation4], 1

</llo_original>
